<compile_context>
chip_gen: v5e
topology: v5e:2x2
jax: 0.10.0
libtpu: 0.0.40
codegen_flags: <defaults>
</compile_context>

<pallas_src>
import jax
import jax.numpy as jnp
from jax.experimental import pallas as pl
from jax.experimental.pallas import tpu as pltpu


def _leaky_relu(x, slope=0.2):
    return jnp.where(x > 0, x, slope * x)


def _round_up(x, m):
    return ((x + m - 1) // m) * m


def mlp_d_kernel(xt_ref, ct_ref,
                 w1x_ref, w1c_ref, b1_ref,
                 w2_ref, b2_ref,
                 w3_ref, b3_ref,
                 w4c_ref, b4_ref,
                 o_ref):
    f32 = jnp.float32

    # Layer 1: (ndf*4, nf) @ (nf, tm) + (ndf*4, nc) @ (nc, tm) + b1.
    # Split matmul instead of a lane-axis concat; both partials accumulate
    # in f32; the weight (LHS) is grid-invariant, the batch streams through N.
    h = (jnp.dot(w1x_ref[...], xt_ref[...], preferred_element_type=f32)
         + jnp.dot(w1c_ref[...], ct_ref[...], preferred_element_type=f32)
         + b1_ref[...])
    h = _leaky_relu(h)

    # Layer 2: (ndf*2, ndf*4) @ (ndf*4, tm)
    h = jnp.dot(w2_ref[...], h, preferred_element_type=f32) + b2_ref[...]
    h = _leaky_relu(h)

    # Layer 3: (ndf, ndf*2) @ (ndf*2, tm)
    h = jnp.dot(w3_ref[...], h, preferred_element_type=f32) + b3_ref[...]
    h = _leaky_relu(h)

    # Head: (ndf, tm) -> (1, tm).  An M=1 matmul wastes an MXU pass, so use
    # VPU broadcast-multiply + XLU sublane reduce; the store is lane-dense.
    logit = jnp.sum(h * w4c_ref[...], axis=0, keepdims=True) + b4_ref[...]
    o_ref[...] = logit.astype(o_ref.dtype)


def mlp_d_forward(x, c, params, *, tm_max=512):
    """x: (B, n_features) f32, c: (B, n_classes) f32  ->  (B, 1) f32."""
    (w1, b1), (w2, b2), (w3, b3), (w4, b4) = params
    B, n_features = x.shape
    n_classes = c.shape[1]

    # ---- batch tile selection (batch lives on the lane axis) --------------
    # Tiles are multiples of 128 lanes; cap at tm_max (~512) so the layer-1
    # activation (ndf*4, tm) f32 stays within the vreg file (no spills).
    Bp0 = _round_up(B, 128)
    tm = min(tm_max, Bp0)
    grid_m = pl.cdiv(Bp0, tm)
    if grid_m > 1 and grid_m % 2 == 1:
        # Balance v7x's two TensorCores on the "parallel" grid axis; the one
        # extra padded step is noise on single-TC chips.
        grid_m += 1
    Bp = grid_m * tm

    # ---- transposed (batch-on-lanes) input streams, f32 end-to-end --------
    # Pad rows are garbage-in/garbage-out and are dropped by the final slice;
    # no reductions cross the batch axis, so no NaN propagation risk.
    xt = x.T                                     # (n_features, B)
    ct = c.T                                     # (n_classes,  B)
    if Bp != B:
        xt = jnp.pad(xt, ((0, 0), (0, Bp - B)))
        ct = jnp.pad(ct, ((0, 0), (0, Bp - B)))

    # ---- weights: kept in nn.Linear's native (out, in) layout -------------
    w1x = w1[:, :n_features]                     # (ndf*4, n_features)
    w1c = w1[:, n_features:]                     # (ndf*4, n_classes)
    b1c = b1.reshape(-1, 1)                      # (ndf*4, 1)
    b2c = b2.reshape(-1, 1)                      # (ndf*2, 1)
    b3c = b3.reshape(-1, 1)                      # (ndf,   1)
    w4c = w4.reshape(-1, 1)                      # (ndf,   1) column for VPU head
    b4c = b4.reshape(-1, 1)                      # (1,     1)

    # Grid-invariant full-array blocks for weights/biases (no re-DMA across
    # grid steps since the block index never changes).
    full = lambda a: pl.BlockSpec(a.shape, lambda i: (0, 0))

    out = pl.pallas_call(
        mlp_d_kernel,
        out_shape=jax.ShapeDtypeStruct((1, Bp), jnp.float32),
        grid=(grid_m,),
        in_specs=[
            pl.BlockSpec((n_features, tm), lambda i: (0, i)),   # x^T tile
            pl.BlockSpec((n_classes, tm), lambda i: (0, i)),    # c^T tile
            full(w1x), full(w1c), full(b1c),
            full(w2), full(b2c),
            full(w3), full(b3c),
            full(w4c), full(b4c),
        ],
        out_specs=pl.BlockSpec((1, tm), lambda i: (0, i)),      # lane-dense
        compiler_params=pltpu.CompilerParams(
            dimension_semantics=("parallel",)),
    )(xt, ct, w1x, w1c, b1c, w2, b2c, w3, b3c, w4c, b4c)

    return out[0, :B].reshape(B, 1)


def init_params(key, n_classes, n_features, ndf):
    """Deterministic synthetic parameters, stored exactly like nn.Linear."""
    dims = [n_features + n_classes, ndf * 4, ndf * 2, ndf, 1]
    params = []
    for li in range(4):
        fan_in, fan_out = dims[li], dims[li + 1]
        key, kw, kb = jax.random.split(key, 3)
        bound = 1.0 / float(jnp.sqrt(jnp.float32(fan_in)))
        w = jax.random.uniform(kw, (fan_out, fan_in), jnp.float32, -bound, bound)
        b = jax.random.uniform(kb, (fan_out,), jnp.float32, -bound, bound)
        params.append((w, b))
    return params


def mlp_d_reference(x, c, params):
    """Pure-JAX f32 reference identical to the PyTorch forward."""
    (w1, b1), (w2, b2), (w3, b3), (w4, b4) = params
    h = jnp.concatenate([x, c], axis=-1)
    h = h @ w1.T + b1
    h = jnp.where(h > 0, h, 0.2 * h)
    h = h @ w2.T + b2
    h = jnp.where(h > 0, h, 0.2 * h)
    h = h @ w3.T + b3
    h = jnp.where(h > 0, h, 0.2 * h)
    return h @ w4.T + b4


if __name__ == "__main__":
    # Small shapes consistent with the module.
    n_classes, n_features, nz, ndf = 4, 16, 8, 8
    B = 2

    key = jax.random.PRNGKey(0)
    key, kx, kc, kp = jax.random.split(key, 4)

    x = jax.random.normal(kx, (B, n_features), jnp.float32)
    c = jax.random.normal(kc, (B, n_classes), jnp.float32)
    params = init_params(kp, n_classes, n_features, ndf)

    out = jax.block_until_ready(mlp_d_forward(x, c, params))
    ref = mlp_d_reference(x, c, params)
    assert out.shape == (B, 1)
    assert jnp.allclose(out, ref, atol=2e-2, rtol=2e-2), (out, ref)

    # Second check: batch that exercises the multi-tile grid + padding path.
    B2 = 1000
    key, kx2, kc2 = jax.random.split(key, 3)
    x2 = jax.random.normal(kx2, (B2, n_features), jnp.float32)
    c2 = jax.random.normal(kc2, (B2, n_classes), jnp.float32)
    out2 = jax.block_until_ready(mlp_d_forward(x2, c2, params))
    ref2 = mlp_d_reference(x2, c2, params)
    assert out2.shape == (B2, 1)
    assert jnp.allclose(out2, ref2, atol=2e-2, rtol=2e-2)

    print("KERNEL_OK")
</pallas_src>

<mosaic_0001>
module attributes {stable_mosaic.version = 11 : i64} {
  func.func @mlp_d_kernel(%arg0: i32, %arg1: memref<16x128xf32, #tpu.memory_space<vmem>>, %arg2: memref<4x128xf32, #tpu.memory_space<vmem>>, %arg3: memref<32x16xf32, #tpu.memory_space<vmem>>, %arg4: memref<32x4xf32, #tpu.memory_space<vmem>>, %arg5: memref<32x1xf32, #tpu.memory_space<vmem>>, %arg6: memref<16x32xf32, #tpu.memory_space<vmem>>, %arg7: memref<16x1xf32, #tpu.memory_space<vmem>>, %arg8: memref<8x16xf32, #tpu.memory_space<vmem>>, %arg9: memref<8x1xf32, #tpu.memory_space<vmem>>, %arg10: memref<8x1xf32, #tpu.memory_space<vmem>>, %arg11: memref<1x1xf32, #tpu.memory_space<vmem>>, %arg12: memref<1x128xf32, #tpu.memory_space<vmem>>) attributes {dimension_semantics = [#tpu.dimension_semantics<parallel>], iteration_bounds = array<i64: 1>, scalar_prefetch = 0 : i64, scratch_operands = 0 : i64, tpu.core_type = #tpu.core_type<tc>, window_params = [{transform_indices = @transform_0, window_bounds = array<i64: 16, 128>}, {transform_indices = @transform_1, window_bounds = array<i64: 4, 128>}, {pipeline_mode = #tpu.pipeline_mode<synchronous>, transform_indices = @transform_2, window_bounds = array<i64: 32, 16>}, {pipeline_mode = #tpu.pipeline_mode<synchronous>, transform_indices = @transform_3, window_bounds = array<i64: 32, 4>}, {pipeline_mode = #tpu.pipeline_mode<synchronous>, transform_indices = @transform_4, window_bounds = array<i64: 32, 1>}, {pipeline_mode = #tpu.pipeline_mode<synchronous>, transform_indices = @transform_5, window_bounds = array<i64: 16, 32>}, {pipeline_mode = #tpu.pipeline_mode<synchronous>, transform_indices = @transform_6, window_bounds = array<i64: 16, 1>}, {pipeline_mode = #tpu.pipeline_mode<synchronous>, transform_indices = @transform_7, window_bounds = array<i64: 8, 16>}, {pipeline_mode = #tpu.pipeline_mode<synchronous>, transform_indices = @transform_8, window_bounds = array<i64: 8, 1>}, {pipeline_mode = #tpu.pipeline_mode<synchronous>, transform_indices = @transform_9, window_bounds = array<i64: 8, 1>}, {pipeline_mode = #tpu.pipeline_mode<synchronous>, transform_indices = @transform_10, window_bounds = array<i64: 1, 1>}, {transform_indices = @transform_11, window_bounds = array<i64: 1, 128>}]} {
    %c0 = arith.constant 0 : index
    %c0_0 = arith.constant 0 : index
    %0 = vector.load %arg3[%c0, %c0_0] : memref<32x16xf32, #tpu.memory_space<vmem>>, vector<32x16xf32>
    %c0_1 = arith.constant 0 : index
    %c0_2 = arith.constant 0 : index
    %1 = vector.load %arg1[%c0_1, %c0_2] : memref<16x128xf32, #tpu.memory_space<vmem>>, vector<16x128xf32>
    %cst = arith.constant dense<0.000000e+00> : vector<32x128xf32>
    %2 = tpu.matmul %0, %1, %cst {dimension_numbers = #tpu.dot_dimension_numbers<[1], [0], [0], [1], [0, 0, 1, 1], [], []>} : vector<32x16xf32>, vector<16x128xf32>, vector<32x128xf32> -> vector<32x128xf32>
    %c0_3 = arith.constant 0 : index
    %c0_4 = arith.constant 0 : index
    %3 = vector.load %arg4[%c0_3, %c0_4] : memref<32x4xf32, #tpu.memory_space<vmem>>, vector<32x4xf32>
    %c0_5 = arith.constant 0 : index
    %c0_6 = arith.constant 0 : index
    %4 = vector.load %arg2[%c0_5, %c0_6] : memref<4x128xf32, #tpu.memory_space<vmem>>, vector<4x128xf32>
    %cst_7 = arith.constant dense<0.000000e+00> : vector<32x128xf32>
    %5 = tpu.matmul %3, %4, %cst_7 {dimension_numbers = #tpu.dot_dimension_numbers<[1], [0], [0], [1], [0, 0, 1, 1], [], []>} : vector<32x4xf32>, vector<4x128xf32>, vector<32x128xf32> -> vector<32x128xf32>
    %6 = arith.addf %2, %5 : vector<32x128xf32>
    %c0_8 = arith.constant 0 : index
    %c0_9 = arith.constant 0 : index
    %7 = vector.load %arg5[%c0_8, %c0_9] : memref<32x1xf32, #tpu.memory_space<vmem>>, vector<32x1xf32>
    %8 = vector.broadcast %7 : vector<32x1xf32> to vector<32x128xf32>
    %9 = arith.addf %6, %8 : vector<32x128xf32>
    %cst_10 = arith.constant 0.000000e+00 : f32
    %10 = vector.broadcast %cst_10 : f32 to vector<32x128xf32>
    %11 = arith.cmpf ogt, %9, %10 : vector<32x128xf32>
    %cst_11 = arith.constant 2.000000e-01 : f32
    %12 = vector.broadcast %cst_11 : f32 to vector<32x128xf32>
    %13 = arith.mulf %12, %9 : vector<32x128xf32>
    %14 = arith.select %11, %9, %13 : vector<32x128xi1>, vector<32x128xf32>
    %c0_12 = arith.constant 0 : index
    %c0_13 = arith.constant 0 : index
    %15 = vector.load %arg6[%c0_12, %c0_13] : memref<16x32xf32, #tpu.memory_space<vmem>>, vector<16x32xf32>
    %cst_14 = arith.constant dense<0.000000e+00> : vector<16x128xf32>
    %16 = tpu.matmul %15, %14, %cst_14 {dimension_numbers = #tpu.dot_dimension_numbers<[1], [0], [0], [1], [0, 0, 1, 1], [], []>} : vector<16x32xf32>, vector<32x128xf32>, vector<16x128xf32> -> vector<16x128xf32>
    %c0_15 = arith.constant 0 : index
    %c0_16 = arith.constant 0 : index
    %17 = vector.load %arg7[%c0_15, %c0_16] : memref<16x1xf32, #tpu.memory_space<vmem>>, vector<16x1xf32>
    %18 = vector.broadcast %17 : vector<16x1xf32> to vector<16x128xf32>
    %19 = arith.addf %16, %18 : vector<16x128xf32>
    %cst_17 = arith.constant 0.000000e+00 : f32
    %20 = vector.broadcast %cst_17 : f32 to vector<16x128xf32>
    %21 = arith.cmpf ogt, %19, %20 : vector<16x128xf32>
    %cst_18 = arith.constant 2.000000e-01 : f32
    %22 = vector.broadcast %cst_18 : f32 to vector<16x128xf32>
    %23 = arith.mulf %22, %19 : vector<16x128xf32>
    %24 = arith.select %21, %19, %23 : vector<16x128xi1>, vector<16x128xf32>
    %c0_19 = arith.constant 0 : index
    %c0_20 = arith.constant 0 : index
    %25 = vector.load %arg8[%c0_19, %c0_20] : memref<8x16xf32, #tpu.memory_space<vmem>>, vector<8x16xf32>
    %cst_21 = arith.constant dense<0.000000e+00> : vector<8x128xf32>
    %26 = tpu.matmul %25, %24, %cst_21 {dimension_numbers = #tpu.dot_dimension_numbers<[1], [0], [0], [1], [0, 0, 1, 1], [], []>} : vector<8x16xf32>, vector<16x128xf32>, vector<8x128xf32> -> vector<8x128xf32>
    %c0_22 = arith.constant 0 : index
    %c0_23 = arith.constant 0 : index
    %27 = vector.load %arg9[%c0_22, %c0_23] : memref<8x1xf32, #tpu.memory_space<vmem>>, vector<8x1xf32>
    %28 = vector.broadcast %27 : vector<8x1xf32> to vector<8x128xf32>
    %29 = arith.addf %26, %28 : vector<8x128xf32>
    %cst_24 = arith.constant 0.000000e+00 : f32
    %30 = vector.broadcast %cst_24 : f32 to vector<8x128xf32>
    %31 = arith.cmpf ogt, %29, %30 : vector<8x128xf32>
    %cst_25 = arith.constant 2.000000e-01 : f32
    %32 = vector.broadcast %cst_25 : f32 to vector<8x128xf32>
    %33 = arith.mulf %32, %29 : vector<8x128xf32>
    %34 = arith.select %31, %29, %33 : vector<8x128xi1>, vector<8x128xf32>
    %c0_26 = arith.constant 0 : index
    %c0_27 = arith.constant 0 : index
    %35 = vector.load %arg10[%c0_26, %c0_27] : memref<8x1xf32, #tpu.memory_space<vmem>>, vector<8x1xf32>
    %36 = vector.broadcast %35 : vector<8x1xf32> to vector<8x128xf32>
    %37 = arith.mulf %34, %36 : vector<8x128xf32>
    %cst_28 = arith.constant dense<0.000000e+00> : vector<128xf32>
    %38 = vector.multi_reduction <add>, %37, %cst_28 [0] : vector<8x128xf32> to vector<128xf32>
    %39 = vector.shape_cast %38 : vector<128xf32> to vector<1x128xf32>
    %c0_29 = arith.constant 0 : index
    %c0_30 = arith.constant 0 : index
    %40 = vector.load %arg11[%c0_29, %c0_30] : memref<1x1xf32, #tpu.memory_space<vmem>>, vector<1x1xf32>
    %41 = vector.broadcast %40 : vector<1x1xf32> to vector<1x128xf32>
    %42 = arith.addf %39, %41 : vector<1x128xf32>
    %c0_31 = arith.constant 0 : index
    %c0_32 = arith.constant 0 : index
    %43 = vector.load %arg12[%c0_31, %c0_32] : memref<1x128xf32, #tpu.memory_space<vmem>>, vector<1x128xf32>
    tpu.vector_store %arg12[%c0_31, %c0_32], %42 {strides = array<i32>} : memref<1x128xf32, #tpu.memory_space<vmem>>, vector<1x128xf32>,
    return
  }
  func.func @transform_0(%arg0: i32) -> (i32, i32) {
    %c0_i32 = arith.constant 0 : i32
    %c0_i32_0 = arith.constant 0 : i32
    return %c0_i32, %arg0 : i32, i32
  }
  func.func @transform_1(%arg0: i32) -> (i32, i32) {
    %c0_i32 = arith.constant 0 : i32
    %c0_i32_0 = arith.constant 0 : i32
    return %c0_i32, %arg0 : i32, i32
  }
  func.func @transform_2(%arg0: i32) -> (i32, i32) {
    %c0_i32 = arith.constant 0 : i32
    %c0_i32_0 = arith.constant 0 : i32
    %c0_i32_1 = arith.constant 0 : i32
    return %c0_i32, %c0_i32_0 : i32, i32
  }
  func.func @transform_3(%arg0: i32) -> (i32, i32) {
    %c0_i32 = arith.constant 0 : i32
    %c0_i32_0 = arith.constant 0 : i32
    %c0_i32_1 = arith.constant 0 : i32
    return %c0_i32, %c0_i32_0 : i32, i32
  }
  func.func @transform_4(%arg0: i32) -> (i32, i32) {
    %c0_i32 = arith.constant 0 : i32
    %c0_i32_0 = arith.constant 0 : i32
    %c0_i32_1 = arith.constant 0 : i32
    return %c0_i32, %c0_i32_0 : i32, i32
  }
  func.func @transform_5(%arg0: i32) -> (i32, i32) {
    %c0_i32 = arith.constant 0 : i32
    %c0_i32_0 = arith.constant 0 : i32
    %c0_i32_1 = arith.constant 0 : i32
    return %c0_i32, %c0_i32_0 : i32, i32
  }
  func.func @transform_6(%arg0: i32) -> (i32, i32) {
    %c0_i32 = arith.constant 0 : i32
    %c0_i32_0 = arith.constant 0 : i32
    %c0_i32_1 = arith.constant 0 : i32
    return %c0_i32, %c0_i32_0 : i32, i32
  }
  func.func @transform_7(%arg0: i32) -> (i32, i32) {
    %c0_i32 = arith.constant 0 : i32
    %c0_i32_0 = arith.constant 0 : i32
    %c0_i32_1 = arith.constant 0 : i32
    return %c0_i32, %c0_i32_0 : i32, i32
  }
  func.func @transform_8(%arg0: i32) -> (i32, i32) {
    %c0_i32 = arith.constant 0 : i32
    %c0_i32_0 = arith.constant 0 : i32
    %c0_i32_1 = arith.constant 0 : i32
    return %c0_i32, %c0_i32_0 : i32, i32
  }
  func.func @transform_9(%arg0: i32) -> (i32, i32) {
    %c0_i32 = arith.constant 0 : i32
    %c0_i32_0 = arith.constant 0 : i32
    %c0_i32_1 = arith.constant 0 : i32
    return %c0_i32, %c0_i32_0 : i32, i32
  }
  func.func @transform_10(%arg0: i32) -> (i32, i32) {
    %c0_i32 = arith.constant 0 : i32
    %c0_i32_0 = arith.constant 0 : i32
    %c0_i32_1 = arith.constant 0 : i32
    return %c0_i32, %c0_i32_0 : i32, i32
  }
  func.func @transform_11(%arg0: i32) -> (i32, i32) {
    %c0_i32 = arith.constant 0 : i32
    %c0_i32_0 = arith.constant 0 : i32
    return %c0_i32, %arg0 : i32, i32
  }
}

</mosaic_0001>

<llo_original>
// kernel: tpu_custom_call.1
$region0: #{tpu_custom_call.1}
  #allocation0 [shape = 'u32[]', space=smem, size = 0x4, offset = 0x4, fixed_abs, tag = 'smem constant byte address 0x4 - core index']
  #allocation1 [shape = 'u32[72,128]{1,0:T(1,128)}', space=vmem, size = 0x9000, scoped, tag = 'internal scratch']
  #allocation2 [shape = 'f32[1,1]{1,0:T(1,128)S(1)}', space=vmem, size = 0x200, scoped, tag = 'scoped memory for tpu_custom_call.1']
  %s0 = inlined_call_operand.vmem [shape: f32[16,128], index: 0, kind: input, shape index: {}]
  %s1 = inlined_call_operand.vmem [shape: f32[4,128], index: 1, kind: input, shape index: {}]
  %s2 = inlined_call_operand.vmem [shape: f32[32,16], index: 2, kind: input, shape index: {}]
  %s3 = inlined_call_operand.vmem [shape: f32[32,4], index: 3, kind: input, shape index: {}]
  %s4 = inlined_call_operand.vmem [shape: f32[32,1], index: 4, kind: input, shape index: {}]
  %s5 = inlined_call_operand.vmem [shape: f32[16,32], index: 5, kind: input, shape index: {}]
  %s6 = inlined_call_operand.vmem [shape: f32[16,1], index: 6, kind: input, shape index: {}]
  %s7 = inlined_call_operand.vmem [shape: f32[8,16], index: 7, kind: input, shape index: {}]
  %s8 = inlined_call_operand.vmem [shape: f32[8,1], index: 8, kind: input, shape index: {}]
  %s9 = inlined_call_operand.vmem [shape: f32[8,1], index: 9, kind: input, shape index: {}]
  %s10 = inlined_call_operand.<no memory space> [shape: f32[1,1], index: 10, kind: input, shape index: {}]
  %s11 = inlined_call_operand.hbm [shape: f32[1,128], index: 11, kind: output, shape index: {}]
  %s12 = sld [smem:[#allocation0]]
  $region54: #{tpu_custom_call.1} parent=0
    _
  %s14 = ssub.s32 1, %s12
  %s15 = scalar_select 0, %s14, %s12
  %v16 = vstv %s10
  %17 = vst [vmem:[#allocation2] sm:$0x1] %v16
  $region1: #{tpu_custom_call.1} parent=0
    #allocation3 [shape = 'u8[512]{0}', space=vmem, size = 0x400, scoped, tag = 'output window, operand 0, single buffered']
    #allocation4 [shape = 's32[1]{0}', space=sflag, size = 0x4, scoped, tag = 'scoped memory for tpu_custom_call.1']
    %18 = vsyncpa [#allocation4], 0
    // Predicated region
    $region2: #{tpu_custom_call.1} parent=1 // pred_check
      _
    $region3: #{tpu_custom_call.1} parent=1 // pred_check_branch
      %20 = sbr.rel (0) target = $region5
    $region4: #{tpu_custom_call.1} parent=1 // pred_region
      _
    $region5: #{tpu_custom_call.1} parent=1 // pred_fallthru
      _
    // Predicated region
    $region6: #{tpu_custom_call.1} parent=1 // pred_check
      _
    $region7: #{tpu_custom_call.1} parent=1 // pred_check_branch
      %22 = sbr.rel (0) target = $region9
    $region8: #{tpu_custom_call.1} parent=1 // pred_region
      _
    $region9: #{tpu_custom_call.1} parent=1 // pred_fallthru
      _
    // Predicated region
    $region10: #{tpu_custom_call.1} parent=1 // pred_check
      _
    $region11: #{tpu_custom_call.1} parent=1 // pred_check_branch
      %24 = sbr.rel (0) target = $region13
    $region12: #{tpu_custom_call.1} parent=1 // pred_region
      _
    $region13: #{tpu_custom_call.1} parent=1 // pred_fallthru
      _
    // Predicated region
    $region14: #{tpu_custom_call.1} parent=1 // pred_check
      _
    $region15: #{tpu_custom_call.1} parent=1 // pred_check_branch
      %26 = sbr.rel (0) target = $region17
    $region16: #{tpu_custom_call.1} parent=1 // pred_region
      _
    $region17: #{tpu_custom_call.1} parent=1 // pred_fallthru
      _
    // Predicated region
    $region18: #{tpu_custom_call.1} parent=1 // pred_check
      _
    $region19: #{tpu_custom_call.1} parent=1 // pred_check_branch
      %28 = sbr.rel (0) target = $region21
    $region20: #{tpu_custom_call.1} parent=1 // pred_region
      _
    $region21: #{tpu_custom_call.1} parent=1 // pred_fallthru
      _
    // Predicated region
    $region22: #{tpu_custom_call.1} parent=1 // pred_check
      _
    $region23: #{tpu_custom_call.1} parent=1 // pred_check_branch
      %30 = sbr.rel (0) target = $region25
    $region24: #{tpu_custom_call.1} parent=1 // pred_region
      _
    $region25: #{tpu_custom_call.1} parent=1 // pred_fallthru
      _
    // Predicated region
    $region26: #{tpu_custom_call.1} parent=1 // pred_check
      _
    $region27: #{tpu_custom_call.1} parent=1 // pred_check_branch
      %32 = sbr.rel (0) target = $region29
    $region28: #{tpu_custom_call.1} parent=1 // pred_region
      _
    $region29: #{tpu_custom_call.1} parent=1 // pred_fallthru
      _
    // Predicated region
    $region30: #{tpu_custom_call.1} parent=1 // pred_check
      _
    $region31: #{tpu_custom_call.1} parent=1 // pred_check_branch
      %34 = sbr.rel (0) target = $region33
    $region32: #{tpu_custom_call.1} parent=1 // pred_region
      _
    $region33: #{tpu_custom_call.1} parent=1 // pred_fallthru
      _
    // Predicated region
    $region34: #{tpu_custom_call.1} parent=1 // pred_check
      _
    $region35: #{tpu_custom_call.1} parent=1 // pred_check_branch
      %36 = sbr.rel (0) target = $region37
    $region36: #{tpu_custom_call.1} parent=1 // pred_region
      _
    $region37: #{tpu_custom_call.1} parent=1 // pred_fallthru
      _
    // Predicated region
    $region38: #{tpu_custom_call.1} parent=1 // pred_check
      _
    $region39: #{tpu_custom_call.1} parent=1 // pred_check_branch
      %38 = sbr.rel (0) target = $region41
    $region40: #{tpu_custom_call.1} parent=1 // pred_region
      _
    $region41: #{tpu_custom_call.1} parent=1 // pred_fallthru
      _
    // Predicated region
    $region42: #{tpu_custom_call.1} parent=1 // pred_check
      _
    $region43: #{tpu_custom_call.1} parent=1 // pred_check_branch
      %40 = sbr.rel (0) target = $region45
    $region44: #{tpu_custom_call.1} parent=1 // pred_region
      _
    $region45: #{tpu_custom_call.1} parent=1 // pred_fallthru
      _
    %v41 = vld [vmem:[%s2] sm:$0xff]
    %v42 = vld [vmem:[%s2 + $0x8] sm:$0xff]
    %v43 = vld [vmem:[%s2 + $0x10] sm:$0xff]
    %v44 = vld [vmem:[%s2 + $0x18] sm:$0xff]
    %v45 = vld [vmem:[%s0] sm:$0xff]
    %v46 = vld [vmem:[%s0 + $0x8] sm:$0xff]
    %v47 = vld [vmem:[%s3] sm:$0xff]
    %v48 = vld [vmem:[%s3 + $0x8] sm:$0xff]
    %v49 = vld [vmem:[%s3 + $0x10] sm:$0xff]
    %v50 = vld [vmem:[%s3 + $0x18] sm:$0xff]
    %v51 = vld [vmem:[%s1] sm:$0xf]
    %vm52 = vcmask 31744
    %v54 = vsel %vm52, %v47, 0
    %v57 = vsel %vm52, %v48, 0
    %v60 = vsel %vm52, %v49, 0
    %v63 = vsel %vm52, %v50, 0
    %vm65 = vcmask 1043456
    %v67 = vsel %vm65, %v51, 0
    %69 = vmatpush.msra.mxu0 0.0
    %70 = vmatpush.msra.mxu0 0.0
    %71 = vmatpush.msra.mxu0 0.0
    %72 = vmatpush.msra.mxu0 0.0
    %73 = vmatpush.msra.mxu0 0.0
    %74 = vmatpush.msra.mxu0 0.0
    %75 = vmatpush.msra.mxu0 0.0
    %76 = vmatpush.msra.mxu0 0.0
    %77 = vmatpush.msra.mxu0 0.0
    %78 = vmatpush.msra.mxu0 0.0
    %79 = vmatpush.msra.mxu0 0.0
    %80 = vmatpush.msra.mxu0 0.0
    %81 = vmatpush.msra.mxu0 0.0
    %82 = vmatpush.msra.mxu0 0.0
    %83 = vmatpush.msra.mxu0 0.0
    %84 = vmatpush.msra.mxu0 %v67
    %85 = vmatmul.f32.gmra.mxu0 %v54
    %v86 = vpop.f32.mrf.mxu0
    %v87 = vadd.f32 0.0, %v86
    %88 = vmatmul.f32.gmra.mxu0 %v57
    %v89 = vpop.f32.mrf.mxu0
    %v90 = vadd.f32 0.0, %v89
    %91 = vmatmul.f32.gmra.mxu0 %v60
    %v92 = vpop.f32.mrf.mxu0
    %v93 = vadd.f32 0.0, %v92
    %94 = vmatmul.f32.gmra.mxu0 %v63
    %v95 = vpop.f32.mrf.mxu0
    %v96 = vadd.f32 0.0, %v95
    %97 = vdwg.mxu0
    %vm98 = vcmask 130048
    %v100 = vsel %vm98, %v41, 0
    %v103 = vsel %vm98, %v42, 0
    %v106 = vsel %vm98, %v43, 0
    %v109 = vsel %vm98, %v44, 0
    %111 = vmatpush.msra.mxu0 0.0
    %112 = vmatpush.msra.mxu0 0.0
    %113 = vmatpush.msra.mxu0 0.0
    %114 = vmatpush.msra.mxu0 0.0
    %115 = vmatpush.msra.mxu0 0.0
    %116 = vmatpush.msra.mxu0 0.0
    %117 = vmatpush.msra.mxu0 0.0
    %118 = vmatpush.msra.mxu0 0.0
    %119 = vmatpush.msra.mxu0 0.0
    %120 = vmatpush.msra.mxu0 0.0
    %121 = vmatpush.msra.mxu0 0.0
    %122 = vmatpush.msra.mxu0 0.0
    %123 = vmatpush.msra.mxu0 0.0
    %124 = vmatpush.msra.mxu0 0.0
    %125 = vmatpush.msra.mxu0 %v46
    %126 = vmatpush.msra.mxu0 %v45
    %127 = vmatmul.f32.gmra.mxu0 %v100
    %v128 = vpop.f32.mrf.mxu0
    %v129 = vadd.f32 %v87, %v128
    %130 = vmatmul.f32.gmra.mxu0 %v103
    %v131 = vpop.f32.mrf.mxu0
    %v132 = vadd.f32 %v90, %v131
    %133 = vmatmul.f32.gmra.mxu0 %v106
    %v134 = vpop.f32.mrf.mxu0
    %v135 = vadd.f32 %v93, %v134
    %136 = vmatmul.f32.gmra.mxu0 %v109
    %v137 = vpop.f32.mrf.mxu0
    %v138 = vadd.f32 %v96, %v137
    %139 = vdwg.mxu0
    %v140 = vld [vmem:[%s4] sm:$0xff]
    %v141 = vld [vmem:[%s4 + $0x8] sm:$0xff]
    %v142 = vld [vmem:[%s4 + $0x10] sm:$0xff]
    %v143 = vld [vmem:[%s4 + $0x18] sm:$0xff]
    %145 = vset.pattern.permute.xlu0 0
    %146 = vperm.xlu0 %145, %v140
    %v147 = vpop.permute.xlu0 %146
    %150 = vset.pattern.permute.xlu0 0
    %151 = vperm.xlu0 %150, %v141
    %v152 = vpop.permute.xlu0 %151
    %155 = vset.pattern.permute.xlu0 0
    %156 = vperm.xlu0 %155, %v142
    %v157 = vpop.permute.xlu0 %156
    %160 = vset.pattern.permute.xlu0 0
    %161 = vperm.xlu0 %160, %v143
    %v162 = vpop.permute.xlu0 %161
    %v164 = vadd.f32 %v129, %v147
    %v165 = vadd.f32 %v132, %v152
    %v166 = vadd.f32 %v135, %v157
    %v167 = vadd.f32 %v138, %v162
    %vm168 = vcmp.gt.f32.partialorder %v164, 0.0
    %vm169 = vcmp.gt.f32.partialorder %v165, 0.0
    %vm170 = vcmp.gt.f32.partialorder %v166, 0.0
    %vm171 = vcmp.gt.f32.partialorder %v167, 0.0
    %v172 = vmul.f32 %v164, 0.2
    %v173 = vmul.f32 %v165, 0.2
    %v174 = vmul.f32 %v166, 0.2
    %v175 = vmul.f32 %v167, 0.2
    %v176 = vsel %vm168, %v164, %v172
    %v177 = vsel %vm169, %v165, %v173
    %v178 = vsel %vm170, %v166, %v174
    %v179 = vsel %vm171, %v167, %v175
    %v180 = vld [vmem:[%s5] sm:$0xff]
    %v181 = vld [vmem:[%s5 + $0x8] sm:$0xff]
    %v182 = vld [vmem:[%s6] sm:$0xff]
    %v183 = vld [vmem:[%s6 + $0x8] sm:$0xff]
    %185 = vset.pattern.permute.xlu0 0
    %186 = vperm.xlu0 %185, %v182
    %v187 = vpop.permute.xlu0 %186
    %190 = vset.pattern.permute.xlu0 0
    %191 = vperm.xlu0 %190, %v183
    %v192 = vpop.permute.xlu0 %191
    %vm194 = vcmask 261120
    %v196 = vsel %vm194, %v180, 0
    %v199 = vsel %vm194, %v181, 0
    %201 = vmatpush.msra.mxu0 0.0
    %202 = vmatpush.msra.mxu0 0.0
    %203 = vmatpush.msra.mxu0 0.0
    %204 = vmatpush.msra.mxu0 0.0
    %205 = vmatpush.msra.mxu0 0.0
    %206 = vmatpush.msra.mxu0 0.0
    %207 = vmatpush.msra.mxu0 0.0
    %208 = vmatpush.msra.mxu0 0.0
    %209 = vmatpush.msra.mxu0 0.0
    %210 = vmatpush.msra.mxu0 0.0
    %211 = vmatpush.msra.mxu0 0.0
    %212 = vmatpush.msra.mxu0 0.0
    %213 = vmatpush.msra.mxu0 %v179
    %214 = vmatpush.msra.mxu0 %v178
    %215 = vmatpush.msra.mxu0 %v177
    %216 = vmatpush.msra.mxu0 %v176
    %217 = vmatmul.f32.gmra.mxu0 %v196
    %v218 = vpop.f32.mrf.mxu0
    %v219 = vadd.f32 %v187, %v218
    %220 = vmatmul.f32.gmra.mxu0 %v199
    %v221 = vpop.f32.mrf.mxu0
    %v222 = vadd.f32 %v192, %v221
    %223 = vdwg.mxu0
    %vm224 = vcmp.gt.f32.partialorder %v219, 0.0
    %vm225 = vcmp.gt.f32.partialorder %v222, 0.0
    %v226 = vmul.f32 %v219, 0.2
    %v227 = vmul.f32 %v222, 0.2
    %v228 = vsel %vm224, %v219, %v226
    %v229 = vsel %vm225, %v222, %v227
    %v230 = vld [vmem:[%s7] sm:$0xff]
    %v231 = vld [vmem:[%s8] sm:$0xff]
    %233 = vset.pattern.permute.xlu0 0
    %234 = vperm.xlu0 %233, %v231
    %v235 = vpop.permute.xlu0 %234
    %v238 = vsel %vm98, %v230, 0
    %240 = vmatpush.msra.mxu0 0.0
    %241 = vmatpush.msra.mxu0 0.0
    %242 = vmatpush.msra.mxu0 0.0
    %243 = vmatpush.msra.mxu0 0.0
    %244 = vmatpush.msra.mxu0 0.0
    %245 = vmatpush.msra.mxu0 0.0
    %246 = vmatpush.msra.mxu0 0.0
    %247 = vmatpush.msra.mxu0 0.0
    %248 = vmatpush.msra.mxu0 0.0
    %249 = vmatpush.msra.mxu0 0.0
    %250 = vmatpush.msra.mxu0 0.0
    %251 = vmatpush.msra.mxu0 0.0
    %252 = vmatpush.msra.mxu0 0.0
    %253 = vmatpush.msra.mxu0 0.0
    %254 = vmatpush.msra.mxu0 %v229
    %255 = vmatpush.msra.mxu0 %v228
    %256 = vmatmul.f32.gmra.mxu0 %v238
    %v257 = vpop.f32.mrf.mxu0
    %v258 = vadd.f32 %v235, %v257
    %259 = vdwg.mxu0
    %vm260 = vcmp.gt.f32.partialorder %v258, 0.0
    %v261 = vmul.f32 %v258, 0.2
    %v262 = vsel %vm260, %v258, %v261
    %v263 = vld [vmem:[%s9] sm:$0xff]
    %265 = vset.pattern.permute.xlu0 0
    %266 = vperm.xlu0 %265, %v263
    %v267 = vpop.permute.xlu0 %266
    %v269 = vmul.f32 %v262, %v267
    %v270 = vrot.slane %v269, 4
    %v271 = vadd.f32 %v269, %v270
    %v272 = vrot.slane %v271, 2
    %v273 = vadd.f32 %v271, %v272
    %v274 = vrot.slane %v273, 1
    %v275 = vadd.f32 %v273, %v274
    %v276 = vld [vmem:[#allocation2] sm:$0x1]
    %278 = vset.pattern.permute.xlu0 0
    %279 = vperm.xlu0 %278, %v276
    %v280 = vpop.permute.xlu0 %279
    %v282 = vperm.slane %v280, 0
    %v283 = vadd.f32 %v275, %v282
    %284 = vst [vmem:[#allocation3] sm:$0x1] %v283
    // Predicated region
    $region46: #{tpu_custom_call.1} parent=1 // pred_check
      _
    $region47: #{tpu_custom_call.1} parent=1 // pred_check_branch
      %286 = sbr.rel (0) target = $region49
    $region48: #{tpu_custom_call.1} parent=1 // pred_region
      %288 = vsyncadd [#allocation4], 0
      %s290 = sshll.u32 [#allocation3], 4
      %s291 = int_to_ptr.vmem [resolvable:$true] %s290
      %s292 = sshll.u32 %s11, 4
      %s293 = int_to_ptr.hbm [resolvable:$true] %s292
      %295 = dma.vmem_to_hbm [thread:$0]  %s291, 16, %s293, [#allocation4]
    $region49: #{tpu_custom_call.1} parent=1 // pred_fallthru
      _
    // Predicated region
    $region50: #{tpu_custom_call.1} parent=1 // pred_check
      _
    $region51: #{tpu_custom_call.1} parent=1 // pred_check_branch
      %297 = sbr.rel (0) target = $region53
    $region52: #{tpu_custom_call.1} parent=1 // pred_region
      %299 = dma.done [#allocation4], 16
    $region53: #{tpu_custom_call.1} parent=1 // pred_fallthru
      _
    %300 = vsyncpa [#allocation4], 1

</llo_original>
